<compile_context>
chip_gen: v5e
topology: v5e:2x2
jax: 0.10.0
libtpu: 0.0.40
codegen_flags: <defaults>
</compile_context>

<pallas_src>
import functools

import jax
import jax.numpy as jnp
import numpy as np
from jax.experimental import pallas as pl
from jax.experimental.pallas import tpu as pltpu

_LANE = 128
# Double-buffered (X + O) tile budget.  12 MiB fits v5e's 16 MiB default
# scoped VMEM and is well under v6e/v7x's 32 MiB default.
_VMEM_TILE_BUDGET = 12 * 1024 * 1024


# ----------------------------------------------------------------------------
# Interpolation-weight construction (trace-time glue, plain JAX).
# Reproduces PyTorch's upsample_bilinear2d source-index math for the T axis.
# ----------------------------------------------------------------------------
def _make_temporal_weights(t_in: int, t_out: int, align_corners: bool,
                           dtype=jnp.float32) -> jax.Array:
    out_idx = jnp.arange(t_out, dtype=jnp.float32)
    if align_corners:
        if t_out == 1:
            src = jnp.zeros((t_out,), jnp.float32)
        else:
            src = out_idx * ((t_in - 1) / (t_out - 1))
    else:
        scale = t_in / t_out
        src = (out_idx + 0.5) * scale - 0.5
        src = jnp.maximum(src, 0.0)  # PyTorch clamps negative source coords
    t0 = jnp.floor(src).astype(jnp.int32)
    t0 = jnp.minimum(t0, t_in - 1)
    t1 = jnp.minimum(t0 + 1, t_in - 1)
    w1 = src - t0.astype(jnp.float32)
    w0 = 1.0 - w1
    rows = jnp.arange(t_out)
    w = jnp.zeros((t_out, t_in), jnp.float32)
    w = w.at[rows, t0].add(w0)
    w = w.at[rows, t1].add(w1)
    return w.astype(dtype)


# ----------------------------------------------------------------------------
# Lane-tile selection: largest tile that divides the (128-padded) lane extent,
# fits the VMEM budget, and (mildly) prefers an even grid for v7x megacore.
# ----------------------------------------------------------------------------
def _choose_tn(n_pad: int, t_in: int, t_out: int, dtype_bytes: int) -> int:
    blocks = n_pad // _LANE
    # bytes per 128-lane column group, double-buffered input + output tiles
    per_block = 2 * (t_in + t_out) * dtype_bytes * _LANE
    cap = max(1, _VMEM_TILE_BUDGET // per_block)

    divs = set()
    i = 1
    while i * i <= blocks:
        if blocks % i == 0:
            divs.add(i)
            divs.add(blocks // i)
        i += 1
    divs = sorted(d for d in divs if d <= cap)
    best = divs[-1]

    # Megacore friendliness: prefer an even grid if it costs <= 2x tile size.
    grid = blocks // best
    if grid > 1 and grid % 2 == 1:
        for d in reversed(divs):
            if (blocks // d) % 2 == 0 and 2 * d >= best:
                best = d
                break
    return best * _LANE


# ----------------------------------------------------------------------------
# Pallas kernel: one (T_out, tn) output tile = W (T_out, T) @ X-tile (T, tn).
# ----------------------------------------------------------------------------
def _interp_matmul_kernel(w_ref, x_ref, o_ref):
    o_ref[...] = jnp.dot(
        w_ref[...], x_ref[...], preferred_element_type=jnp.float32
    ).astype(o_ref.dtype)


@functools.partial(jax.jit, static_argnames=("output_size", "align_corners"))
def grid_trilinear_3d(x: jax.Array, output_size, align_corners: bool = False):
    """Pallas equivalent of GridTrilinear3D.forward.

    x: (T, H, W, C)  ->  (T_out, H, W, C) with T_out = output_size[0].
    """
    T, H, W, C = x.shape
    assert H == output_size[1] and W == output_size[2], (
        "only temporal rescaling is supported (matches the PyTorch module)")
    t_out = output_size[0]
    n = H * W * C

    # Native-dtype I/O (F.interpolate only takes floats; mirror that).
    if not jnp.issubdtype(x.dtype, jnp.floating):
        x = x.astype(jnp.float32)
    dtype = x.dtype
    dtype_bytes = jnp.dtype(dtype).itemsize

    w_mat = _make_temporal_weights(T, t_out, align_corners, dtype=dtype)
    x_flat = x.reshape(T, n)

    # Pad lane axis to a multiple of 128 so every store is lane-dense.
    n_pad = ((n + _LANE - 1) // _LANE) * _LANE
    if n_pad != n:
        x_flat = jnp.pad(x_flat, ((0, 0), (0, n_pad - n)))

    tn = _choose_tn(n_pad, T, t_out, dtype_bytes)
    grid = (n_pad // tn,)

    cost = pl.CostEstimate(
        flops=2 * t_out * T * n_pad,
        transcendentals=0,
        bytes_accessed=(T + t_out) * n_pad * dtype_bytes
                       + t_out * T * dtype_bytes,
    )

    out_flat = pl.pallas_call(
        _interp_matmul_kernel,
        out_shape=jax.ShapeDtypeStruct((t_out, n_pad), dtype),
        grid_spec=pltpu.PrefetchScalarGridSpec(
            num_scalar_prefetch=0,
            grid=grid,
            in_specs=[
                pl.BlockSpec((t_out, T), lambda j: (0, 0)),   # interp weights
                pl.BlockSpec((T, tn), lambda j: (0, j)),      # features tile
            ],
            out_specs=pl.BlockSpec((t_out, tn), lambda j: (0, j)),
        ),
        compiler_params=pltpu.CompilerParams(
            dimension_semantics=("parallel",),
            vmem_limit_bytes=32 * 1024 * 1024,
        ),
        cost_estimate=cost,
    )(w_mat, x_flat)

    if n_pad != n:
        out_flat = out_flat[:, :n]
    return out_flat.reshape(t_out, H, W, C)


# ----------------------------------------------------------------------------
# Pure-JAX reference (same math, no Pallas, f32 accumulation).
# ----------------------------------------------------------------------------
def _reference(x, output_size, align_corners=False):
    T, H, W, C = x.shape
    t_out = output_size[0]
    w_mat = _make_temporal_weights(T, t_out, align_corners, jnp.float32)
    out = w_mat @ x.reshape(T, -1).astype(jnp.float32)
    return out.reshape(t_out, H, W, C).astype(x.dtype)


if __name__ == "__main__":
    key = jax.random.PRNGKey(0)
    k1, k2 = jax.random.split(key)

    # Case 1: f32, lane-aligned features. Temporal upsample 8 -> 16 frames,
    # spatial 16x16, 4 channels (n = 1024).
    T, H, W, C = 8, 16, 16, 4
    out_size = (16, H, W)
    x = jax.random.normal(k1, (T, H, W, C), dtype=jnp.float32)
    out = jax.block_until_ready(grid_trilinear_3d(x, out_size, False))
    ref = _reference(x, out_size, False)
    np.testing.assert_allclose(np.asarray(out), np.asarray(ref),
                               rtol=1e-5, atol=1e-5)
    assert out.shape == out_size + (C,)
    assert out.dtype == x.dtype

    # Case 2: bf16 input, ragged lane count (5*5*3 = 75 -> padded to 128),
    # align_corners=True, temporal 6 -> 9.
    T2, H2, W2, C2 = 6, 5, 5, 3
    out_size2 = (9, H2, W2)
    x2 = jax.random.normal(k2, (T2, H2, W2, C2), dtype=jnp.bfloat16)
    out2 = jax.block_until_ready(grid_trilinear_3d(x2, out_size2, True))
    ref2 = _reference(x2, out_size2, True)
    np.testing.assert_allclose(np.asarray(out2.astype(jnp.float32)),
                               np.asarray(ref2.astype(jnp.float32)),
                               rtol=6e-2, atol=6e-2)
    assert out2.shape == out_size2 + (C2,)
    assert out2.dtype == jnp.bfloat16

    print("KERNEL_OK")
</pallas_src>

<mosaic_0001>
module attributes {stable_mosaic.version = 11 : i64} {
  func.func @_interp_matmul_kernel(%arg0: i32, %arg1: memref<16x8xf32, #tpu.memory_space<vmem>>, %arg2: memref<8x1024xf32, #tpu.memory_space<vmem>>, %arg3: memref<16x1024xf32, #tpu.memory_space<vmem>>) attributes {dimension_semantics = [#tpu.dimension_semantics<parallel>], iteration_bounds = array<i64: 1>, scalar_prefetch = 0 : i64, scratch_operands = 0 : i64, tpu.core_type = #tpu.core_type<tc>, window_params = [{pipeline_mode = #tpu.pipeline_mode<synchronous>, transform_indices = @transform_0, window_bounds = array<i64: 16, 8>}, {transform_indices = @transform_1, window_bounds = array<i64: 8, 1024>}, {transform_indices = @transform_2, window_bounds = array<i64: 16, 1024>}]} {
    %c0 = arith.constant 0 : index
    %c0_0 = arith.constant 0 : index
    %0 = vector.load %arg1[%c0, %c0_0] : memref<16x8xf32, #tpu.memory_space<vmem>>, vector<16x8xf32>
    %c0_1 = arith.constant 0 : index
    %c0_2 = arith.constant 0 : index
    %1 = vector.load %arg2[%c0_1, %c0_2] : memref<8x1024xf32, #tpu.memory_space<vmem>>, vector<8x1024xf32>
    %cst = arith.constant dense<0.000000e+00> : vector<16x1024xf32>
    %2 = tpu.matmul %0, %1, %cst {dimension_numbers = #tpu.dot_dimension_numbers<[1], [0], [0], [1], [0, 0, 1, 1], [], []>} : vector<16x8xf32>, vector<8x1024xf32>, vector<16x1024xf32> -> vector<16x1024xf32>
    %c0_3 = arith.constant 0 : index
    %c0_4 = arith.constant 0 : index
    %3 = vector.load %arg3[%c0_3, %c0_4] : memref<16x1024xf32, #tpu.memory_space<vmem>>, vector<16x1024xf32>
    tpu.vector_store %arg3[%c0_3, %c0_4], %2 {strides = array<i32>} : memref<16x1024xf32, #tpu.memory_space<vmem>>, vector<16x1024xf32>,
    return
  }
  func.func @transform_0(%arg0: i32) -> (i32, i32) {
    %c0_i32 = arith.constant 0 : i32
    %c0_i32_0 = arith.constant 0 : i32
    %c0_i32_1 = arith.constant 0 : i32
    return %c0_i32, %c0_i32_0 : i32, i32
  }
  func.func @transform_1(%arg0: i32) -> (i32, i32) {
    %c0_i32 = arith.constant 0 : i32
    %c0_i32_0 = arith.constant 0 : i32
    return %c0_i32, %arg0 : i32, i32
  }
  func.func @transform_2(%arg0: i32) -> (i32, i32) {
    %c0_i32 = arith.constant 0 : i32
    %c0_i32_0 = arith.constant 0 : i32
    return %c0_i32, %arg0 : i32, i32
  }
}

</mosaic_0001>

<llo_original>
// kernel: grid_trilinear_3d.1
$region0: #{grid_trilinear_3d.1}
  #allocation0 [shape = 'u32[]', space=smem, size = 0x4, offset = 0x4, fixed_abs, tag = 'smem constant byte address 0x4 - core index']
  #allocation1 [shape = 'u32[72,128]{1,0:T(1,128)}', space=vmem, size = 0x9000, scoped, tag = 'internal scratch']
  %s0 = inlined_call_operand.vmem [shape: f32[16,8], index: 0, kind: input, shape index: {}]
  %s1 = inlined_call_operand.vmem [shape: f32[8,1024], index: 1, kind: input, shape index: {}]
  %s2 = inlined_call_operand.vmem [shape: f32[16,1024], index: 2, kind: output, shape index: {}]
  %s3 = sld [smem:[#allocation0]]
  $region18: #{grid_trilinear_3d.1} parent=0
    _
  %s5 = ssub.s32 1, %s3
  %s6 = scalar_select 0, %s5, %s3
  // Predicated region
  $region2: #{grid_trilinear_3d.1} parent=0 // pred_check
    _
  $region3: #{grid_trilinear_3d.1} parent=0 // pred_check_branch
    %8 = sbr.rel (0) target = $region5
  $region4: #{grid_trilinear_3d.1} parent=0 // pred_region
    _
  $region5: #{grid_trilinear_3d.1} parent=0 // pred_fallthru
    _
  // Predicated region
  $region6: #{grid_trilinear_3d.1} parent=0 // pred_check
    _
  $region7: #{grid_trilinear_3d.1} parent=0 // pred_check_branch
    %10 = sbr.rel (0) target = $region9
  $region8: #{grid_trilinear_3d.1} parent=0 // pred_region
    _
  $region9: #{grid_trilinear_3d.1} parent=0 // pred_fallthru
    _
  %v11 = vld [vmem:[%s0] sm:$0xff]
  %v12 = vld [vmem:[%s0 + $0x8] sm:$0xff]
  %v13 = vld [vmem:[%s1] sm:$0xff]
  %v14 = vld [vmem:[%s1 + $0x8] sm:$0xff]
  %v15 = vld [vmem:[%s1 + $0x10] sm:$0xff]
  %v16 = vld [vmem:[%s1 + $0x18] sm:$0xff]
  %v17 = vld [vmem:[%s1 + $0x20] sm:$0xff]
  %v18 = vld [vmem:[%s1 + $0x28] sm:$0xff]
  %v19 = vld [vmem:[%s1 + $0x30] sm:$0xff]
  %v20 = vld [vmem:[%s1 + $0x38] sm:$0xff]
  %vm21 = vcmask 64512
  %v23 = vsel %vm21, %v11, 0
  %v26 = vsel %vm21, %v12, 0
  %28 = vmatpush.msra.mxu0 0.0
  %29 = vmatpush.msra.mxu0 0.0
  %30 = vmatpush.msra.mxu0 0.0
  %31 = vmatpush.msra.mxu0 0.0
  %32 = vmatpush.msra.mxu0 0.0
  %33 = vmatpush.msra.mxu0 0.0
  %34 = vmatpush.msra.mxu0 0.0
  %35 = vmatpush.msra.mxu0 0.0
  %36 = vmatpush.msra.mxu0 0.0
  %37 = vmatpush.msra.mxu0 0.0
  %38 = vmatpush.msra.mxu0 0.0
  %39 = vmatpush.msra.mxu0 0.0
  %40 = vmatpush.msra.mxu0 0.0
  %41 = vmatpush.msra.mxu0 0.0
  %42 = vmatpush.msra.mxu0 0.0
  %43 = vmatpush.msra.mxu0 %v13
  %44 = vmatmul.f32.gmra.mxu0 %v23
  %v45 = vpop.f32.mrf.mxu0
  %v46 = vadd.f32 0.0, %v45
  %47 = vmatmul.f32.gmra.mxu0 %v26
  %v48 = vpop.f32.mrf.mxu0
  %v49 = vadd.f32 0.0, %v48
  %50 = vdwg.mxu0
  %51 = vmatpush.msra.mxu0 0.0
  %52 = vmatpush.msra.mxu0 0.0
  %53 = vmatpush.msra.mxu0 0.0
  %54 = vmatpush.msra.mxu0 0.0
  %55 = vmatpush.msra.mxu0 0.0
  %56 = vmatpush.msra.mxu0 0.0
  %57 = vmatpush.msra.mxu0 0.0
  %58 = vmatpush.msra.mxu0 0.0
  %59 = vmatpush.msra.mxu0 0.0
  %60 = vmatpush.msra.mxu0 0.0
  %61 = vmatpush.msra.mxu0 0.0
  %62 = vmatpush.msra.mxu0 0.0
  %63 = vmatpush.msra.mxu0 0.0
  %64 = vmatpush.msra.mxu0 0.0
  %65 = vmatpush.msra.mxu0 0.0
  %66 = vmatpush.msra.mxu0 %v14
  %67 = vmatmul.f32.gmra.mxu0 %v23
  %v68 = vpop.f32.mrf.mxu0
  %v69 = vadd.f32 0.0, %v68
  %70 = vmatmul.f32.gmra.mxu0 %v26
  %v71 = vpop.f32.mrf.mxu0
  %v72 = vadd.f32 0.0, %v71
  %73 = vdwg.mxu0
  %74 = vmatpush.msra.mxu0 0.0
  %75 = vmatpush.msra.mxu0 0.0
  %76 = vmatpush.msra.mxu0 0.0
  %77 = vmatpush.msra.mxu0 0.0
  %78 = vmatpush.msra.mxu0 0.0
  %79 = vmatpush.msra.mxu0 0.0
  %80 = vmatpush.msra.mxu0 0.0
  %81 = vmatpush.msra.mxu0 0.0
  %82 = vmatpush.msra.mxu0 0.0
  %83 = vmatpush.msra.mxu0 0.0
  %84 = vmatpush.msra.mxu0 0.0
  %85 = vmatpush.msra.mxu0 0.0
  %86 = vmatpush.msra.mxu0 0.0
  %87 = vmatpush.msra.mxu0 0.0
  %88 = vmatpush.msra.mxu0 0.0
  %89 = vmatpush.msra.mxu0 %v15
  %90 = vmatmul.f32.gmra.mxu0 %v23
  %v91 = vpop.f32.mrf.mxu0
  %v92 = vadd.f32 0.0, %v91
  %93 = vmatmul.f32.gmra.mxu0 %v26
  %v94 = vpop.f32.mrf.mxu0
  %v95 = vadd.f32 0.0, %v94
  %96 = vdwg.mxu0
  %97 = vmatpush.msra.mxu0 0.0
  %98 = vmatpush.msra.mxu0 0.0
  %99 = vmatpush.msra.mxu0 0.0
  %100 = vmatpush.msra.mxu0 0.0
  %101 = vmatpush.msra.mxu0 0.0
  %102 = vmatpush.msra.mxu0 0.0
  %103 = vmatpush.msra.mxu0 0.0
  %104 = vmatpush.msra.mxu0 0.0
  %105 = vmatpush.msra.mxu0 0.0
  %106 = vmatpush.msra.mxu0 0.0
  %107 = vmatpush.msra.mxu0 0.0
  %108 = vmatpush.msra.mxu0 0.0
  %109 = vmatpush.msra.mxu0 0.0
  %110 = vmatpush.msra.mxu0 0.0
  %111 = vmatpush.msra.mxu0 0.0
  %112 = vmatpush.msra.mxu0 %v16
  %113 = vmatmul.f32.gmra.mxu0 %v23
  %v114 = vpop.f32.mrf.mxu0
  %v115 = vadd.f32 0.0, %v114
  %116 = vmatmul.f32.gmra.mxu0 %v26
  %v117 = vpop.f32.mrf.mxu0
  %v118 = vadd.f32 0.0, %v117
  %119 = vdwg.mxu0
  %120 = vmatpush.msra.mxu0 0.0
  %121 = vmatpush.msra.mxu0 0.0
  %122 = vmatpush.msra.mxu0 0.0
  %123 = vmatpush.msra.mxu0 0.0
  %124 = vmatpush.msra.mxu0 0.0
  %125 = vmatpush.msra.mxu0 0.0
  %126 = vmatpush.msra.mxu0 0.0
  %127 = vmatpush.msra.mxu0 0.0
  %128 = vmatpush.msra.mxu0 0.0
  %129 = vmatpush.msra.mxu0 0.0
  %130 = vmatpush.msra.mxu0 0.0
  %131 = vmatpush.msra.mxu0 0.0
  %132 = vmatpush.msra.mxu0 0.0
  %133 = vmatpush.msra.mxu0 0.0
  %134 = vmatpush.msra.mxu0 0.0
  %135 = vmatpush.msra.mxu0 %v17
  %136 = vmatmul.f32.gmra.mxu0 %v23
  %v137 = vpop.f32.mrf.mxu0
  %v138 = vadd.f32 0.0, %v137
  %139 = vmatmul.f32.gmra.mxu0 %v26
  %v140 = vpop.f32.mrf.mxu0
  %v141 = vadd.f32 0.0, %v140
  %142 = vdwg.mxu0
  %143 = vmatpush.msra.mxu0 0.0
  %144 = vmatpush.msra.mxu0 0.0
  %145 = vmatpush.msra.mxu0 0.0
  %146 = vmatpush.msra.mxu0 0.0
  %147 = vmatpush.msra.mxu0 0.0
  %148 = vmatpush.msra.mxu0 0.0
  %149 = vmatpush.msra.mxu0 0.0
  %150 = vmatpush.msra.mxu0 0.0
  %151 = vmatpush.msra.mxu0 0.0
  %152 = vmatpush.msra.mxu0 0.0
  %153 = vmatpush.msra.mxu0 0.0
  %154 = vmatpush.msra.mxu0 0.0
  %155 = vmatpush.msra.mxu0 0.0
  %156 = vmatpush.msra.mxu0 0.0
  %157 = vmatpush.msra.mxu0 0.0
  %158 = vmatpush.msra.mxu0 %v18
  %159 = vmatmul.f32.gmra.mxu0 %v23
  %v160 = vpop.f32.mrf.mxu0
  %v161 = vadd.f32 0.0, %v160
  %162 = vmatmul.f32.gmra.mxu0 %v26
  %v163 = vpop.f32.mrf.mxu0
  %v164 = vadd.f32 0.0, %v163
  %165 = vdwg.mxu0
  %166 = vmatpush.msra.mxu0 0.0
  %167 = vmatpush.msra.mxu0 0.0
  %168 = vmatpush.msra.mxu0 0.0
  %169 = vmatpush.msra.mxu0 0.0
  %170 = vmatpush.msra.mxu0 0.0
  %171 = vmatpush.msra.mxu0 0.0
  %172 = vmatpush.msra.mxu0 0.0
  %173 = vmatpush.msra.mxu0 0.0
  %174 = vmatpush.msra.mxu0 0.0
  %175 = vmatpush.msra.mxu0 0.0
  %176 = vmatpush.msra.mxu0 0.0
  %177 = vmatpush.msra.mxu0 0.0
  %178 = vmatpush.msra.mxu0 0.0
  %179 = vmatpush.msra.mxu0 0.0
  %180 = vmatpush.msra.mxu0 0.0
  %181 = vmatpush.msra.mxu0 %v19
  %182 = vmatmul.f32.gmra.mxu0 %v23
  %v183 = vpop.f32.mrf.mxu0
  %v184 = vadd.f32 0.0, %v183
  %185 = vmatmul.f32.gmra.mxu0 %v26
  %v186 = vpop.f32.mrf.mxu0
  %v187 = vadd.f32 0.0, %v186
  %188 = vdwg.mxu0
  %189 = vmatpush.msra.mxu0 0.0
  %190 = vmatpush.msra.mxu0 0.0
  %191 = vmatpush.msra.mxu0 0.0
  %192 = vmatpush.msra.mxu0 0.0
  %193 = vmatpush.msra.mxu0 0.0
  %194 = vmatpush.msra.mxu0 0.0
  %195 = vmatpush.msra.mxu0 0.0
  %196 = vmatpush.msra.mxu0 0.0
  %197 = vmatpush.msra.mxu0 0.0
  %198 = vmatpush.msra.mxu0 0.0
  %199 = vmatpush.msra.mxu0 0.0
  %200 = vmatpush.msra.mxu0 0.0
  %201 = vmatpush.msra.mxu0 0.0
  %202 = vmatpush.msra.mxu0 0.0
  %203 = vmatpush.msra.mxu0 0.0
  %204 = vmatpush.msra.mxu0 %v20
  %205 = vmatmul.f32.gmra.mxu0 %v23
  %v206 = vpop.f32.mrf.mxu0
  %v207 = vadd.f32 0.0, %v206
  %208 = vmatmul.f32.gmra.mxu0 %v26
  %v209 = vpop.f32.mrf.mxu0
  %v210 = vadd.f32 0.0, %v209
  %211 = vdwg.mxu0
  %212 = vst [vmem:[%s2] sm:$0xff] %v46
  %213 = vst [vmem:[%s2 + $0x8] sm:$0xff] %v69
  %214 = vst [vmem:[%s2 + $0x10] sm:$0xff] %v92
  %215 = vst [vmem:[%s2 + $0x18] sm:$0xff] %v115
  %216 = vst [vmem:[%s2 + $0x20] sm:$0xff] %v138
  %217 = vst [vmem:[%s2 + $0x28] sm:$0xff] %v161
  %218 = vst [vmem:[%s2 + $0x30] sm:$0xff] %v184
  %219 = vst [vmem:[%s2 + $0x38] sm:$0xff] %v207
  %220 = vst [vmem:[%s2 + $0x40] sm:$0xff] %v49
  %221 = vst [vmem:[%s2 + $0x48] sm:$0xff] %v72
  %222 = vst [vmem:[%s2 + $0x50] sm:$0xff] %v95
  %223 = vst [vmem:[%s2 + $0x58] sm:$0xff] %v118
  %224 = vst [vmem:[%s2 + $0x60] sm:$0xff] %v141
  %225 = vst [vmem:[%s2 + $0x68] sm:$0xff] %v164
  %226 = vst [vmem:[%s2 + $0x70] sm:$0xff] %v187
  %227 = vst [vmem:[%s2 + $0x78] sm:$0xff] %v210
  // Predicated region
  $region10: #{grid_trilinear_3d.1} parent=0 // pred_check
    _
  $region11: #{grid_trilinear_3d.1} parent=0 // pred_check_branch
    %229 = sbr.rel (0) target = $region13
  $region12: #{grid_trilinear_3d.1} parent=0 // pred_region
    _
  $region13: #{grid_trilinear_3d.1} parent=0 // pred_fallthru
    _
  // Predicated region
  $region14: #{grid_trilinear_3d.1} parent=0 // pred_check
    _
  $region15: #{grid_trilinear_3d.1} parent=0 // pred_check_branch
    %231 = sbr.rel (0) target = $region17
  $region16: #{grid_trilinear_3d.1} parent=0 // pred_region
    _
  $region17: #{grid_trilinear_3d.1} parent=0 // pred_fallthru
    _

</llo_original>
